<compile_context>
chip_gen: v6e
topology: v6e:2x2x1
jax: 0.10.0
libtpu: 0.0.40
codegen_flags: <defaults>
</compile_context>

<pallas_src>
import jax
import jax.numpy as jnp
from jax.experimental import pallas as pl
from jax.experimental.pallas import tpu as pltpu


# ---------------------------------------------------------------------------
# Parameter setup (glue, plain JAX): Euler angles -> rotation matrix
# ---------------------------------------------------------------------------
def euler_to_matrix(r):
    """r = (rx, ry, rz) -> R = Rz @ Ry @ Rx, shape (3, 3)."""
    rx, ry, rz = r[0], r[1], r[2]
    one, zero = jnp.ones_like(rx), jnp.zeros_like(rx)
    cx, sx = jnp.cos(rx), jnp.sin(rx)
    cy, sy = jnp.cos(ry), jnp.sin(ry)
    cz, sz = jnp.cos(rz), jnp.sin(rz)

    Rx = jnp.stack([jnp.stack([one, zero, zero]),
                    jnp.stack([zero, cx, -sx]),
                    jnp.stack([zero, sx, cx])])
    Ry = jnp.stack([jnp.stack([cy, zero, sy]),
                    jnp.stack([zero, one, zero]),
                    jnp.stack([-sy, zero, cy])])
    Rz = jnp.stack([jnp.stack([cz, -sz, zero]),
                    jnp.stack([sz, cz, zero]),
                    jnp.stack([zero, zero, one])])
    return Rz @ Ry @ Rx


# ---------------------------------------------------------------------------
# Pallas kernel: out[c, :] = sum_k R[c,k] * x[k, :] + t[c]   (VPU FMAs only)
# ---------------------------------------------------------------------------
def cam2laser_kernel(p_ref, x_ref, o_ref):
    # p_ref: SMEM (12,) f32 = [R00,R01,R02, R10,R11,R12, R20,R21,R22, t0,t1,t2]
    # x_ref / o_ref: (3, tile_n) VMEM tiles, points along the lane axis.
    x0 = x_ref[0:1, :]
    x1 = x_ref[1:2, :]
    x2 = x_ref[2:3, :]
    o_ref[0:1, :] = p_ref[0] * x0 + p_ref[1] * x1 + p_ref[2] * x2 + p_ref[9]
    o_ref[1:2, :] = p_ref[3] * x0 + p_ref[4] * x1 + p_ref[5] * x2 + p_ref[10]
    o_ref[2:3, :] = p_ref[6] * x0 + p_ref[7] * x1 + p_ref[8] * x2 + p_ref[11]
    # activation = identity (the module's default lambda x: x)


def cam2laser(x, r, t, *, tile_n=8192):
    """x: (N, 3) points; r, t: (3,) params. Returns (N, 3), same as the module."""
    N, C = x.shape
    assert C == 3

    R = euler_to_matrix(r).astype(jnp.float32)
    params = jnp.concatenate([R.reshape(9), t.reshape(3).astype(jnp.float32)])

    # Lane-dense layout: one cheap transpose in the wrapper.
    # TODO(synk): keep the point cloud stored as (3, N) upstream to drop this.
    xt = x.T.astype(jnp.float32)                      # (3, N)

    tile = min(tile_n, 128 * pl.cdiv(N, 128))         # multiple of 128
    grid = (pl.cdiv(N, tile),)                        # ragged tail masked by Pallas

    out_t = pl.pallas_call(
        cam2laser_kernel,
        out_shape=jax.ShapeDtypeStruct((3, N), jnp.float32),
        grid_spec=pltpu.PrefetchScalarGridSpec(
            num_scalar_prefetch=1,                    # params -> SMEM
            grid=grid,
            in_specs=[pl.BlockSpec((3, tile), lambda i, p: (0, i))],
            out_specs=pl.BlockSpec((3, tile), lambda i, p: (0, i)),
        ),
        compiler_params=pltpu.CompilerParams(
            dimension_semantics=("parallel",)),
    )(params, xt)

    return out_t.T.astype(x.dtype)                    # back to (N, 3)


if __name__ == "__main__":
    key = jax.random.PRNGKey(0)
    N = 1000                                          # small, non-multiple of 128
    x = jax.random.normal(key, (N, 3), dtype=jnp.float32)

    # Parameters exactly as in Cam2laser.__init__: zeros(3) each.
    r = jnp.zeros((3,), dtype=jnp.float32)
    t = jnp.zeros((3,), dtype=jnp.float32)

    # tile_n=256 -> 4 grid steps at this demo size (exercises multi-step grid
    # + ragged final block); production point clouds should use the default.
    out = jax.block_until_ready(cam2laser(x, r, t, tile_n=256))
    ref = x @ euler_to_matrix(r).T + t.reshape(1, 3)
    assert out.shape == (N, 3)
    assert jnp.allclose(out, ref, atol=1e-5, rtol=1e-5)

    # Self-consistency for nonzero angles / translation (same convention).
    k1, k2 = jax.random.split(key)
    r2 = jax.random.normal(k1, (3,), dtype=jnp.float32)
    t2 = jax.random.normal(k2, (3,), dtype=jnp.float32)
    out2 = jax.block_until_ready(cam2laser(x, r2, t2, tile_n=256))
    ref2 = x @ euler_to_matrix(r2).T + t2.reshape(1, 3)
    assert jnp.allclose(out2, ref2, atol=1e-4, rtol=1e-4)

    print("KERNEL_OK")
</pallas_src>

<mosaic_0001>
module attributes {stable_mosaic.version = 11 : i64} {
  func.func @cam2laser_kernel(%arg0: i32, %arg1: memref<12xf32, #tpu.memory_space<smem>>, %arg2: memref<3x256xf32, #tpu.memory_space<vmem>>, %arg3: memref<3x256xf32, #tpu.memory_space<vmem>>) attributes {dimension_semantics = [#tpu.dimension_semantics<parallel>], iteration_bounds = array<i64: 4>, scalar_prefetch = 1 : i64, scratch_operands = 0 : i64, tpu.core_type = #tpu.core_type<tc>, window_params = [{transform_indices = @transform_0, window_bounds = array<i64: 3, 256>}, {transform_indices = @transform_1, window_bounds = array<i64: 3, 256>}]} {
    %c0 = arith.constant 0 : index
    %c0_0 = arith.constant 0 : index
    %0 = vector.load %arg2[%c0, %c0_0] : memref<3x256xf32, #tpu.memory_space<vmem>>, vector<1x256xf32>
    %c1 = arith.constant 1 : index
    %c0_1 = arith.constant 0 : index
    %1 = vector.load %arg2[%c1, %c0_1] : memref<3x256xf32, #tpu.memory_space<vmem>>, vector<1x256xf32>
    %c2 = arith.constant 2 : index
    %c0_2 = arith.constant 0 : index
    %2 = vector.load %arg2[%c2, %c0_2] : memref<3x256xf32, #tpu.memory_space<vmem>>, vector<1x256xf32>
    %c0_3 = arith.constant 0 : index
    %3 = memref.load %arg1[%c0_3] : memref<12xf32, #tpu.memory_space<smem>>
    %4 = vector.broadcast %3 : f32 to vector<1x256xf32>
    %5 = arith.mulf %4, %0 : vector<1x256xf32>
    %c1_4 = arith.constant 1 : index
    %6 = memref.load %arg1[%c1_4] : memref<12xf32, #tpu.memory_space<smem>>
    %7 = vector.broadcast %6 : f32 to vector<1x256xf32>
    %8 = arith.mulf %7, %1 : vector<1x256xf32>
    %9 = arith.addf %5, %8 : vector<1x256xf32>
    %c2_5 = arith.constant 2 : index
    %10 = memref.load %arg1[%c2_5] : memref<12xf32, #tpu.memory_space<smem>>
    %11 = vector.broadcast %10 : f32 to vector<1x256xf32>
    %12 = arith.mulf %11, %2 : vector<1x256xf32>
    %13 = arith.addf %9, %12 : vector<1x256xf32>
    %c9 = arith.constant 9 : index
    %14 = memref.load %arg1[%c9] : memref<12xf32, #tpu.memory_space<smem>>
    %15 = vector.broadcast %14 : f32 to vector<1x256xf32>
    %16 = arith.addf %13, %15 : vector<1x256xf32>
    %c0_6 = arith.constant 0 : index
    %c0_7 = arith.constant 0 : index
    %17 = vector.load %arg3[%c0_6, %c0_7] : memref<3x256xf32, #tpu.memory_space<vmem>>, vector<1x256xf32>
    tpu.vector_store %arg3[%c0_6, %c0_7], %16 {strides = array<i32>} : memref<3x256xf32, #tpu.memory_space<vmem>>, vector<1x256xf32>,
    %c3 = arith.constant 3 : index
    %18 = memref.load %arg1[%c3] : memref<12xf32, #tpu.memory_space<smem>>
    %19 = vector.broadcast %18 : f32 to vector<1x256xf32>
    %20 = arith.mulf %19, %0 : vector<1x256xf32>
    %c4 = arith.constant 4 : index
    %21 = memref.load %arg1[%c4] : memref<12xf32, #tpu.memory_space<smem>>
    %22 = vector.broadcast %21 : f32 to vector<1x256xf32>
    %23 = arith.mulf %22, %1 : vector<1x256xf32>
    %24 = arith.addf %20, %23 : vector<1x256xf32>
    %c5 = arith.constant 5 : index
    %25 = memref.load %arg1[%c5] : memref<12xf32, #tpu.memory_space<smem>>
    %26 = vector.broadcast %25 : f32 to vector<1x256xf32>
    %27 = arith.mulf %26, %2 : vector<1x256xf32>
    %28 = arith.addf %24, %27 : vector<1x256xf32>
    %c10 = arith.constant 10 : index
    %29 = memref.load %arg1[%c10] : memref<12xf32, #tpu.memory_space<smem>>
    %30 = vector.broadcast %29 : f32 to vector<1x256xf32>
    %31 = arith.addf %28, %30 : vector<1x256xf32>
    %c1_8 = arith.constant 1 : index
    %c0_9 = arith.constant 0 : index
    %32 = vector.load %arg3[%c1_8, %c0_9] : memref<3x256xf32, #tpu.memory_space<vmem>>, vector<1x256xf32>
    tpu.vector_store %arg3[%c1_8, %c0_9], %31 {strides = array<i32>} : memref<3x256xf32, #tpu.memory_space<vmem>>, vector<1x256xf32>,
    %c6 = arith.constant 6 : index
    %33 = memref.load %arg1[%c6] : memref<12xf32, #tpu.memory_space<smem>>
    %34 = vector.broadcast %33 : f32 to vector<1x256xf32>
    %35 = arith.mulf %34, %0 : vector<1x256xf32>
    %c7 = arith.constant 7 : index
    %36 = memref.load %arg1[%c7] : memref<12xf32, #tpu.memory_space<smem>>
    %37 = vector.broadcast %36 : f32 to vector<1x256xf32>
    %38 = arith.mulf %37, %1 : vector<1x256xf32>
    %39 = arith.addf %35, %38 : vector<1x256xf32>
    %c8 = arith.constant 8 : index
    %40 = memref.load %arg1[%c8] : memref<12xf32, #tpu.memory_space<smem>>
    %41 = vector.broadcast %40 : f32 to vector<1x256xf32>
    %42 = arith.mulf %41, %2 : vector<1x256xf32>
    %43 = arith.addf %39, %42 : vector<1x256xf32>
    %c11 = arith.constant 11 : index
    %44 = memref.load %arg1[%c11] : memref<12xf32, #tpu.memory_space<smem>>
    %45 = vector.broadcast %44 : f32 to vector<1x256xf32>
    %46 = arith.addf %43, %45 : vector<1x256xf32>
    %c2_10 = arith.constant 2 : index
    %c0_11 = arith.constant 0 : index
    %47 = vector.load %arg3[%c2_10, %c0_11] : memref<3x256xf32, #tpu.memory_space<vmem>>, vector<1x256xf32>
    tpu.vector_store %arg3[%c2_10, %c0_11], %46 {strides = array<i32>} : memref<3x256xf32, #tpu.memory_space<vmem>>, vector<1x256xf32>,
    return
  }
  func.func @transform_0(%arg0: i32, %arg1: memref<12xf32, #tpu.memory_space<smem>>) -> (i32, i32) {
    %c0_i32 = arith.constant 0 : i32
    %c0_i32_0 = arith.constant 0 : i32
    return %c0_i32, %arg0 : i32, i32
  }
  func.func @transform_1(%arg0: i32, %arg1: memref<12xf32, #tpu.memory_space<smem>>) -> (i32, i32) {
    %c0_i32 = arith.constant 0 : i32
    %c0_i32_0 = arith.constant 0 : i32
    return %c0_i32, %arg0 : i32, i32
  }
}

</mosaic_0001>

<llo_original>
// kernel: tpu_custom_call.1
$region0: #{tpu_custom_call.1}
  #allocation0 [shape = 'u32[]', space=smem, size = 0x4, offset = 0x4, fixed_abs, tag = 'smem constant byte address 0x4 - core index']
  #allocation1 [shape = 'u32[144,128]{1,0:T(1,128)}', space=vmem, size = 0x12000, scoped, tag = 'internal scratch']
  #allocation2 [shape = 's32[1]{0}', space=sflag, size = 0x4, scoped, tag = 'scoped memory for tpu_custom_call.1']
  #allocation3 [shape = 'u8[512]{0}', space=smem, size = 0x200, scoped, tag = 'prefetched SMEM operand 0']
  %s0 = inlined_call_operand.hbm [shape: f32[12], index: 0, kind: input, shape index: {}]
  %s1 = inlined_call_operand.hbm [shape: f32[3,1000], index: 1, kind: input, shape index: {}]
  %s2 = inlined_call_operand.hbm [shape: f32[3,1000], index: 2, kind: output, shape index: {}]
  %s3 = sld [smem:[#allocation0]]
  $region41: #{tpu_custom_call.1} parent=0
    _
  %s5 = ssub.s32 1, %s3
  %s6 = scalar_select 0, %s5, %s3
  %8 = dma.hbm_to_smem %s0, 16, [#allocation3], [#allocation2]
  %9 = dma.done [#allocation2], 16
  %10 = sfence
  $region1: #{tpu_custom_call.1} parent=0
    #allocation4 [shape = 'u8[8192]{0}', space=vmem, size = 0x2000, scoped, tag = 'input window, operand 1']
    #allocation5 [shape = 's32[2]{0}', space=sflag, size = 0x8, scoped, tag = 'scoped memory for tpu_custom_call.1']
    #allocation6 [shape = 's32[2]{0}', space=sflag, size = 0x8, scoped, tag = 'scoped memory for tpu_custom_call.1']
    #allocation7 [shape = 'u8[8192]{0}', space=vmem, size = 0x2000, scoped, tag = 'output window, operand 0']
    %11 = vsyncpa [#allocation5], 0
    %s12 = scalar_lea.sflag [#allocation5], 1
    %13 = vsyncpa %s12, 0
    %14 = vsyncpa [#allocation6], 0
    %s15 = scalar_lea.sflag [#allocation6], 1
    %16 = vsyncpa %s15, 0
    loop: start=0, step=1, limit=6
    $region2: #{tpu_custom_call.1} parent=1 // loop_pre_header
      _
    $region3: #{tpu_custom_call.1} parent=1 // loop_header
      %s18 = sphi 0, %s22
      %p19 = scmp.ge.s32.totalorder %s18, 6
      %s28 = sphi 0, %s30
      %s31 = sphi 0, %s28
      %s32 = sphi 0, %s31
      %s48 = sphi 0, %s32
      %s54 = sphi 0, %s56
      %s57 = sphi 0, %s54
      %s58 = sphi 0, %s57
      %s74 = sphi 0, %s58
    $region4: #{tpu_custom_call.1} parent=1 // loop_header_branch
      %21 = sbr.rel (%p19) target = $region8
    $region5: #{tpu_custom_call.1} parent=1 // loop_body
      %s23 = ssub.s32 %s18, 1
      %s24 = ssub.s32 %s18, 2
      %s25 = sadd.s32 %s18, 1
      %s26 = ssub.s32 %s18, %s25
      %p27 = scmp.eq.s32.totalorder %s26, 0
      %s29 = sadd.s32 %s28, 1
      %s30 = scalar_select %p27, %s28, %s29
      %p33 = pneg %p27
      %p34 = scmp.eq.s32.totalorder %s18, 3
      %p35 = por %p33, %p34
      %p36 = scmp.ne.s32.totalorder %s28, %s31
      %p37 = scmp.eq.s32.totalorder %s18, 0
      %p38 = por %p36, %p37
      %p39 = scmp.ne.s32.totalorder %s28, %s31
      %p40 = scmp.eq.s32.totalorder %s23, 3
      %p41 = por %p39, %p40
      %p42 = scmp.ne.s32.totalorder %s31, %s32
      %p43 = scmp.eq.s32.totalorder %s23, 0
      %p44 = por %p42, %p43
      %p45 = scmp.ne.s32.totalorder %s31, %s32
      %p46 = scmp.eq.s32.totalorder %s24, 3
      %p47 = por %p45, %p46
      %p49 = scmp.ne.s32.totalorder %s32, %s48
      %p50 = scmp.eq.s32.totalorder %s24, 0
      %p51 = por %p49, %p50
      %s52 = ssub.s32 %s18, %s25
      %p53 = scmp.eq.s32.totalorder %s52, 0
      %s55 = sadd.s32 %s54, 1
      %s56 = scalar_select %p53, %s54, %s55
      %p59 = pneg %p53
      %p60 = scmp.eq.s32.totalorder %s18, 3
      %p61 = por %p59, %p60
      %p62 = scmp.ne.s32.totalorder %s54, %s57
      %p63 = scmp.eq.s32.totalorder %s18, 0
      %p64 = por %p62, %p63
      %p65 = scmp.ne.s32.totalorder %s54, %s57
      %p66 = scmp.eq.s32.totalorder %s23, 3
      %p67 = por %p65, %p66
      %p68 = scmp.ne.s32.totalorder %s57, %s58
      %p69 = scmp.eq.s32.totalorder %s23, 0
      %p70 = por %p68, %p69
      %p71 = scmp.ne.s32.totalorder %s57, %s58
      %p72 = scmp.eq.s32.totalorder %s24, 3
      %p73 = por %p71, %p72
      %p75 = scmp.ne.s32.totalorder %s58, %s74
      %p76 = scmp.eq.s32.totalorder %s24, 0
      %p77 = por %p75, %p76
      %p78 = scmp.le.s32.totalorder 1, %s18
      %p79 = scmp.lt.s32.totalorder %s18, 5
      %p80 = pnand %p78, %p79
      %p81 = pneg %p80
      // Predicated region
      $region9: #{tpu_custom_call.1} parent=5 // pred_check
        _
      $region10: #{tpu_custom_call.1} parent=5 // pred_check_branch
        %83 = sbr.rel (%p80) target = $region12
      $region11: #{tpu_custom_call.1} parent=5 // pred_region
        %s84 = ssub.s32 %s18, 1
      $region12: #{tpu_custom_call.1} parent=5 // pred_fallthru
        _
      %p85 = scmp.lt.s32.totalorder %s18, 4
      // Predicated region
      $region13: #{tpu_custom_call.1} parent=5 // pred_check
        %p86 = pneg %p85
      $region14: #{tpu_custom_call.1} parent=5 // pred_check_branch
        %88 = sbr.rel (%p86) target = $region16
      $region15: #{tpu_custom_call.1} parent=5 // pred_region
        // Predicated region
        $region17: #{tpu_custom_call.1} parent=15 // pred_check
          %p89 = pneg %p38
        $region18: #{tpu_custom_call.1} parent=15 // pred_check_branch
          %91 = sbr.rel (%p89) target = $region20
        $region19: #{tpu_custom_call.1} parent=15 // pred_region
          %s92 = sand.u32 %s28, 1
          %s93 = scalar_lea.sflag [#allocation5], %s92
          %s94 = sand.u32 %s28, 1
          %s95 = smul.addr %s94, 8
          %s96 = scalar_lea.vmem [#allocation4], %s95
          %s97 = smul.u32 2, %s18
          %s99 = ssub.s32 128, 128
          %100 = vsyncadd %s93, %s99
          %s101 = smul.addr %s97, 64
          %s102 = scalar_lea.hbm %s1, %s101
          %s104 = sshll.u32 %s96, 4
          %s105 = int_to_ptr.vmem [resolvable:$true] %s104
          %107 = dma.hbm_to_vmem [thread:$0]  %s102, 128, %s105, %s93
        $region20: #{tpu_custom_call.1} parent=15 // pred_fallthru
          _
      $region16: #{tpu_custom_call.1} parent=5 // pred_fallthru
        _
      %p108 = scmp.le.s32.totalorder 1, %s18
      %p109 = scmp.lt.s32.totalorder %s18, 5
      %p110 = pnand %p108, %p109
      %p111 = pneg %p110
      // Predicated region
      $region21: #{tpu_custom_call.1} parent=5 // pred_check
        _
      $region22: #{tpu_custom_call.1} parent=5 // pred_check_branch
        %113 = sbr.rel (%p110) target = $region24
      $region23: #{tpu_custom_call.1} parent=5 // pred_region
        %s114 = ssub.s32 %s18, 1
        %s115 = sand.u32 %s31, 1
        %s116 = scalar_lea.sflag [#allocation5], %s115
        %s117 = sand.u32 %s31, 1
        %s118 = smul.addr %s117, 8
        %s119 = scalar_lea.vmem [#allocation4], %s118
        // Predicated region
        $region25: #{tpu_custom_call.1} parent=23 // pred_check
          %p120 = pneg %p44
        $region26: #{tpu_custom_call.1} parent=23 // pred_check_branch
          %122 = sbr.rel (%p120) target = $region28
        $region27: #{tpu_custom_call.1} parent=23 // pred_region
          %123 = dma.done %s116, 128
        $region28: #{tpu_custom_call.1} parent=23 // pred_fallthru
          _
        %s124 = sand.u32 %s31, 1
        %s125 = scalar_lea.sflag [#allocation5], %s124
        %s126 = sand.u32 %s31, 1
        %s127 = smul.addr %s126, 8
        %s128 = scalar_lea.vmem [#allocation4], %s127
        %p129 = pneg %p44
        %p130 = pneg %p41
        %p131 = pneg %p70
        %p132 = pneg %p67
        %s133 = sand.u32 %s57, 1
        %s134 = scalar_lea.sflag [#allocation6], %s133
        %s135 = sand.u32 %s57, 1
        %s136 = smul.addr %s135, 8
        %s137 = scalar_lea.vmem [#allocation7], %s136
        %s138 = smul.u32 2, %s23
        %s139 = smul.u32 2, %s23
        %v140 = vld [vmem:[%s119] ss:$4 sm:$0x3]
        %s141 = scalar_lea.vmem %s119, 1 [#allocation4]
        %v142 = vld [vmem:[%s141] ss:$4 sm:$0x3]
        %s143 = scalar_lea.vmem %s119, 2 [#allocation4]
        %v144 = vld [vmem:[%s143] ss:$4 sm:$0x3]
        %s145 = sld [smem:[#allocation3]]
        %v146 = vstv %s145
        %v147 = vmul.f32 %v146, %v140
        %s148 = sld [smem:[#allocation3 + $0x1]]
        %v149 = vstv %s148
        %v150 = vmul.f32 %v149, %v142
        %v151 = vadd.f32 %v147, %v150
        %s152 = sld [smem:[#allocation3 + $0x2]]
        %v153 = vstv %s152
        %v154 = vmul.f32 %v153, %v144
        %v155 = vadd.f32 %v151, %v154
        %s156 = sld [smem:[#allocation3 + $0x9]]
        %v157 = vstv %s156
        %v158 = vadd.f32 %v155, %v157
        %v159 = vlaneseq
        %vm160 = vcmp.ge.s32.totalorder %v159, 0
        %vm161 = vcmp.lt.s32.totalorder %v159, 256
        %vm162 = vmand %vm160, %vm161
        %163 = vst.msk [vmem:[%s137] ss:$4 sm:$0x3] %vm162, %v158
        %s164 = sld [smem:[#allocation3 + $0x3]]
        %v165 = vstv %s164
        %v166 = vmul.f32 %v165, %v140
        %s167 = sld [smem:[#allocation3 + $0x4]]
        %v168 = vstv %s167
        %v169 = vmul.f32 %v168, %v142
        %v170 = vadd.f32 %v166, %v169
        %s171 = sld [smem:[#allocation3 + $0x5]]
        %v172 = vstv %s171
        %v173 = vmul.f32 %v172, %v144
        %v174 = vadd.f32 %v170, %v173
        %s175 = sld [smem:[#allocation3 + $0xa]]
        %v176 = vstv %s175
        %v177 = vadd.f32 %v174, %v176
        %s178 = scalar_lea.vmem %s137, 1 [#allocation7]
        %179 = vst.msk [vmem:[%s178] ss:$4 sm:$0x3] %vm162, %v177
        %s180 = sld [smem:[#allocation3 + $0x6]]
        %v181 = vstv %s180
        %v182 = vmul.f32 %v181, %v140
        %s183 = sld [smem:[#allocation3 + $0x7]]
        %v184 = vstv %s183
        %v185 = vmul.f32 %v184, %v142
        %v186 = vadd.f32 %v182, %v185
        %s187 = sld [smem:[#allocation3 + $0x8]]
        %v188 = vstv %s187
        %v189 = vmul.f32 %v188, %v144
        %v190 = vadd.f32 %v186, %v189
        %s191 = sld [smem:[#allocation3 + $0xb]]
        %v192 = vstv %s191
        %v193 = vadd.f32 %v190, %v192
        %s194 = scalar_lea.vmem %s137, 2 [#allocation7]
        %195 = vst.msk [vmem:[%s194] ss:$4 sm:$0x3] %vm162, %v193
        %s196 = sand.u32 %s57, 1
        %s197 = scalar_lea.sflag [#allocation6], %s196
        %s198 = sand.u32 %s57, 1
        %s199 = smul.addr %s198, 8
        %s200 = scalar_lea.vmem [#allocation7], %s199
        // Predicated region
        $region29: #{tpu_custom_call.1} parent=23 // pred_check
          %p201 = pneg %p67
        $region30: #{tpu_custom_call.1} parent=23 // pred_check_branch
          %203 = sbr.rel (%p201) target = $region32
        $region31: #{tpu_custom_call.1} parent=23 // pred_region
          %s204 = smul.u32 2, %s23
          %s206 = ssub.s32 128, 128
          %207 = vsyncadd %s197, %s206
          %s208 = smul.addr %s204, 64
          %s209 = scalar_lea.hbm %s2, %s208
          %s211 = sshll.u32 %s200, 4
          %s212 = int_to_ptr.vmem [resolvable:$true] %s211
          %214 = dma.vmem_to_hbm [thread:$0]  %s212, 128, %s209, %s197
        $region32: #{tpu_custom_call.1} parent=23 // pred_fallthru
          _
      $region24: #{tpu_custom_call.1} parent=5 // pred_fallthru
        _
      %p215 = scmp.le.s32.totalorder 2, %s18
      // Predicated region
      $region33: #{tpu_custom_call.1} parent=5 // pred_check
        %p216 = pneg %p215
      $region34: #{tpu_custom_call.1} parent=5 // pred_check_branch
        %218 = sbr.rel (%p216) target = $region36
      $region35: #{tpu_custom_call.1} parent=5 // pred_region
        %s219 = ssub.s32 %s18, 2
        // Predicated region
        $region37: #{tpu_custom_call.1} parent=35 // pred_check
          %p220 = pneg %p73
        $region38: #{tpu_custom_call.1} parent=35 // pred_check_branch
          %222 = sbr.rel (%p220) target = $region40
        $region39: #{tpu_custom_call.1} parent=35 // pred_region
          %s223 = sand.u32 %s58, 1
          %s224 = scalar_lea.sflag [#allocation6], %s223
          %s225 = sand.u32 %s58, 1
          %s226 = smul.addr %s225, 8
          %s227 = scalar_lea.vmem [#allocation7], %s226
          %228 = dma.done %s224, 128
        $region40: #{tpu_custom_call.1} parent=35 // pred_fallthru
          _
      $region36: #{tpu_custom_call.1} parent=5 // pred_fallthru
        _
    $region6: #{tpu_custom_call.1} parent=1 // loop_footer
      %s22 = sadd.s32 1, %s18
    $region7: #{tpu_custom_call.1} parent=1 // loop_footer_branch
      %17 = sbr.rel target = $region3
    $region8: #{tpu_custom_call.1} parent=1 // loop_exit
      _
    %229 = vsyncpa [#allocation5], 1
    %s230 = scalar_lea.sflag [#allocation5], 1
    %231 = vsyncpa %s230, 1
    %232 = vsyncpa [#allocation6], 1
    %s233 = scalar_lea.sflag [#allocation6], 1
    %234 = vsyncpa %s233, 1

</llo_original>
